<compile_context>
chip_gen: v6e
topology: v6e:2x2x1
jax: 0.10.0
libtpu: 0.0.40
codegen_flags: <defaults>
</compile_context>

<pallas_src>
import functools

import jax
import jax.numpy as jnp
from jax import lax
from jax.experimental import pallas as pl
from jax.experimental.pallas import tpu as pltpu


def _action_head_kernel(x_ref, w_ref, b_ref, o_ref, acc_ref, *,
                        inv_mt, mt_total, tile_mt, needs_mask):
    # x_ref: (tile_n, tile_mt, D)   w_ref: (D, H)   b_ref: (1, H)
    # o_ref: (tile_n, H)            acc_ref: (tile_n, D) f32 scratch
    k = pl.program_id(1)

    @pl.when(k == 0)
    def _():
        acc_ref[...] = jnp.zeros_like(acc_ref)

    x = x_ref[...].astype(jnp.float32)
    if needs_mask:
        # Zero out rows of the (possibly padded) tail chunk that lie past MT.
        idx = lax.broadcasted_iota(jnp.int32, (1, tile_mt, 1), 1)
        valid = (k * tile_mt + idx) < mt_total
        x = jnp.where(valid, x, 0.0)

    # Streamed partial sum over this M*T chunk (f32 accumulation).
    acc_ref[...] += jnp.sum(x, axis=1)

    @pl.when(k == pl.num_programs(1) - 1)
    def _():
        pooled = acc_ref[...] * inv_mt                           # mean over M*T
        # fc1: pooled @ W_t + b, with W_t pre-transposed to (D, H) on host.
        y = jnp.dot(pooled, w_ref[...].astype(jnp.float32),
                    preferred_element_type=jnp.float32)          # (tile_n, H)
        y = y + b_ref[...].astype(jnp.float32)
        # F.normalize(dim=-1): y / max(||y||, 1e-12) == y * rsqrt(max(sq, 1e-24))
        sq = jnp.sum(y * y, axis=-1, keepdims=True)
        inv_norm = lax.rsqrt(jnp.maximum(sq, 1e-24))
        o_ref[...] = (y * inv_norm).astype(o_ref.dtype)


def action_head_embed(feat, weight, bias, *, tile_n=128, mt_chunk=None):
    """feat: (N, M, T, J, C); weight: (H, J*C) torch layout; bias: (H,).

    mt_chunk (optional) caps the M*T streaming chunk; by default it is derived
    from the device's VMEM capacity.
    """
    N, M, T, J, C = feat.shape
    D = J * C
    H = weight.shape[0]
    MT = M * T

    # Dropout p=0 is identity.
    # TODO(synk): stochastic dropout (p>0, training mode) not implemented.
    x = feat.reshape(N, MT, D)                       # free reshape
    w_t = jnp.asarray(weight).T                      # one-time host transpose -> (D, H)
    b2 = jnp.asarray(bias).reshape(1, H)

    itemsize_x = jnp.dtype(x.dtype).itemsize
    itemsize_w = jnp.dtype(w_t.dtype).itemsize
    itemsize_b = jnp.dtype(b2.dtype).itemsize
    itemsize_o = jnp.dtype(feat.dtype).itemsize
    # dtype-aware sublane multiple for the second-to-last block dim:
    # 8 for f32, 16 for bf16/f16, 32 for int8/fp8.
    sub_mult = max(8, 32 // itemsize_x)

    # --- batch tile ----------------------------------------------------------
    tile_n = int(min(tile_n, N))
    if N >= 16 and pl.cdiv(N, tile_n) == 1:
        # Ensure >= 2 iterations on the "parallel" N axis so both v7x
        # TensorCores get work (no effect on v5e/v6e correctness or perf).
        tile_n = max(8, (N // 2) // 8 * 8)
    if tile_n != N and tile_n % 8 != 0:
        tile_n = max(8, (tile_n // 8) * 8)
    n_grid = pl.cdiv(N, tile_n)

    # --- VMEM-budgeted M*T chunk ---------------------------------------------
    try:
        vmem_cap = int(pltpu.get_tpu_info().vmem_capacity_bytes)
    except Exception:
        vmem_cap = 64 * 1024 * 1024                  # conservative (v7x per-TC)
    headroom = 4 * 1024 * 1024                       # Mosaic internal scratch

    # TODO(synk): very large D*H (e.g. dim_rep=512, num_joints=17, hidden=2048)
    # would need the weight itself tiled over H; not required at these shapes.
    fixed = (2 * D * H * itemsize_w                  # weight (worst case 2-buf)
             + 2 * H * itemsize_b                    # bias
             + 2 * tile_n * H * itemsize_o           # output
             + tile_n * D * 4)                       # f32 accumulator scratch

    per_mt = 2 * tile_n * D * itemsize_x             # x double-buffer bytes / MT row
    budget_x = max(vmem_cap - headroom - fixed, per_mt * sub_mult)
    tile_mt = budget_x // per_mt
    if mt_chunk is not None:
        tile_mt = min(tile_mt, int(mt_chunk))
    if tile_mt >= MT:
        tile_mt = MT                                 # full axis is always legal
    else:
        tile_mt = max(sub_mult, (tile_mt // sub_mult) * sub_mult)
    tile_mt = int(tile_mt)

    mt_grid = pl.cdiv(MT, tile_mt)
    needs_mask = (MT % tile_mt) != 0

    # Exact VMEM bytes actually used, plus headroom; bounded by physical VMEM.
    vmem_limit = per_mt * tile_mt + fixed + 2 * 1024 * 1024
    vmem_limit = int(min(max(vmem_limit, 16 * 1024 * 1024), vmem_cap))

    kernel = functools.partial(
        _action_head_kernel,
        inv_mt=1.0 / float(MT),
        mt_total=MT,
        tile_mt=tile_mt,
        needs_mask=needs_mask)

    out = pl.pallas_call(
        kernel,
        out_shape=jax.ShapeDtypeStruct((N, H), feat.dtype),
        grid_spec=pltpu.PrefetchScalarGridSpec(
            num_scalar_prefetch=0,
            grid=(n_grid, mt_grid),
            in_specs=[
                pl.BlockSpec((tile_n, tile_mt, D), lambda i, k: (i, k, 0)),
                pl.BlockSpec((D, H), lambda i, k: (0, 0)),
                pl.BlockSpec((1, H), lambda i, k: (0, 0)),
            ],
            out_specs=pl.BlockSpec((tile_n, H), lambda i, k: (i, 0)),
            scratch_shapes=[pltpu.VMEM((tile_n, D), jnp.float32)],
        ),
        compiler_params=pltpu.CompilerParams(
            dimension_semantics=("parallel", "arbitrary"),
            vmem_limit_bytes=vmem_limit),
    )(x, w_t, b2)
    return out


def reference(feat, weight, bias):
    N, M, T, J, C = feat.shape
    f = jnp.transpose(feat, (0, 1, 3, 4, 2)).mean(axis=-1)     # (N, M, J, C)
    f = f.reshape(N, M, -1).mean(axis=1)                        # (N, J*C)
    y = f @ weight.T + bias
    norm = jnp.maximum(jnp.linalg.norm(y, axis=-1, keepdims=True), 1e-12)
    return y / norm


if __name__ == "__main__":
    # Small shapes consistent with the forward: (N, M, T, J, C).
    # T=7 makes MT=14 (not a multiple of 8) so the in-kernel tail mask and the
    # multi-step streamed reduction are both exercised with mt_chunk=8.
    N, M, T, J, C = 2, 2, 7, 4, 32      # dim_rep=C=32, num_joints=J=4 -> D=128
    H = 256                             # hidden_dim

    key = jax.random.PRNGKey(0)
    k_feat, k_w, k_b = jax.random.split(key, 3)

    feat = jax.random.normal(k_feat, (N, M, T, J, C), dtype=jnp.float32)
    bound = 1.0 / (J * C) ** 0.5
    weight = jax.random.uniform(k_w, (H, J * C), minval=-bound, maxval=bound,
                                dtype=jnp.float32)
    bias = jax.random.uniform(k_b, (H,), minval=-bound, maxval=bound,
                              dtype=jnp.float32)

    ref = reference(feat, weight, bias)

    # Path 1: forced small chunk -> 2 reduction steps + masked tail chunk.
    out = jax.block_until_ready(action_head_embed(feat, weight, bias, mt_chunk=8))
    assert out.shape == (N, H)
    assert jnp.allclose(out, ref, atol=1e-5, rtol=1e-5), \
        f"max err {float(jnp.max(jnp.abs(out - ref)))}"

    # Path 2: default VMEM-budgeted chunk (full M*T axis at these toy shapes).
    out2 = jax.block_until_ready(action_head_embed(feat, weight, bias))
    assert jnp.allclose(out2, ref, atol=1e-5, rtol=1e-5), \
        f"max err {float(jnp.max(jnp.abs(out2 - ref)))}"

    print("KERNEL_OK")
</pallas_src>

<mosaic_0001>
module attributes {stable_mosaic.version = 11 : i64} {
  func.func @_action_head_kernel(%arg0: i32, %arg1: i32, %arg2: memref<2x8x128xf32, #tpu.memory_space<vmem>>, %arg3: memref<128x256xf32, #tpu.memory_space<vmem>>, %arg4: memref<1x256xf32, #tpu.memory_space<vmem>>, %arg5: memref<2x256xf32, #tpu.memory_space<vmem>>, %arg6: memref<2x128xf32, #tpu.memory_space<vmem>>) attributes {dimension_semantics = [#tpu.dimension_semantics<parallel>, #tpu.dimension_semantics<arbitrary>], iteration_bounds = array<i64: 1, 2>, scalar_prefetch = 0 : i64, scratch_operands = 1 : i64, tpu.core_type = #tpu.core_type<tc>, window_params = [{transform_indices = @transform_0, window_bounds = array<i64: 2, 8, 128>}, {pipeline_mode = #tpu.pipeline_mode<synchronous>, transform_indices = @transform_1, window_bounds = array<i64: 128, 256>}, {pipeline_mode = #tpu.pipeline_mode<synchronous>, transform_indices = @transform_2, window_bounds = array<i64: 1, 256>}, {transform_indices = @transform_3, window_bounds = array<i64: 2, 256>}]} {
    %c0_i32 = arith.constant 0 : i32
    %0 = arith.cmpi eq, %arg1, %c0_i32 : i32
    %1 = arith.extui %0 : i1 to i32
    %c0_i32_0 = arith.constant 0 : i32
    %2 = arith.cmpi ne, %1, %c0_i32_0 : i32
    scf.if %2 {
      %cst_9 = arith.constant 0.000000e+00 : f32
      %21 = vector.broadcast %cst_9 : f32 to vector<2x128xf32>
      %c0_10 = arith.constant 0 : index
      %c0_11 = arith.constant 0 : index
      %22 = vector.load %arg6[%c0_10, %c0_11] : memref<2x128xf32, #tpu.memory_space<vmem>>, vector<2x128xf32>
      tpu.vector_store %arg6[%c0_10, %c0_11], %21 {strides = array<i32>} : memref<2x128xf32, #tpu.memory_space<vmem>>, vector<2x128xf32>,
    } else {
    }
    %c0 = arith.constant 0 : index
    %c0_1 = arith.constant 0 : index
    %c0_2 = arith.constant 0 : index
    %3 = vector.load %arg2[%c0, %c0_1, %c0_2] : memref<2x8x128xf32, #tpu.memory_space<vmem>>, vector<2x8x128xf32>
    %4 = tpu.iota {dimensions = array<i32: 1>} : vector<1x8x1xi32>
    %c8_i32 = arith.constant 8 : i32
    %5 = arith.muli %arg1, %c8_i32 : i32
    %6 = vector.broadcast %5 : i32 to vector<1x8x1xi32>
    %7 = arith.addi %6, %4 : vector<1x8x1xi32>
    %c14_i32 = arith.constant 14 : i32
    %8 = vector.broadcast %c14_i32 : i32 to vector<1x8x1xi32>
    %9 = arith.cmpi slt, %7, %8 : vector<1x8x1xi32>
    %cst = arith.constant 0.000000e+00 : f32
    %10 = vector.shape_cast %9 : vector<1x8x1xi1> to vector<1x8x1xi1>
    %11 = vector.broadcast %10 : vector<1x8x1xi1> to vector<2x8x128xi1>
    %12 = vector.broadcast %cst : f32 to vector<2x8x128xf32>
    %13 = arith.select %11, %3, %12 : vector<2x8x128xi1>, vector<2x8x128xf32>
    %c0_3 = arith.constant 0 : index
    %c0_4 = arith.constant 0 : index
    %14 = vector.load %arg6[%c0_3, %c0_4] : memref<2x128xf32, #tpu.memory_space<vmem>>, vector<2x128xf32>
    %cst_5 = arith.constant dense<0.000000e+00> : vector<2x128xf32>
    %15 = vector.multi_reduction <add>, %13, %cst_5 [1] : vector<2x8x128xf32> to vector<2x128xf32>
    %16 = arith.addf %14, %15 : vector<2x128xf32>
    %c0_6 = arith.constant 0 : index
    %c0_7 = arith.constant 0 : index
    %17 = vector.load %arg6[%c0_6, %c0_7] : memref<2x128xf32, #tpu.memory_space<vmem>>, vector<2x128xf32>
    tpu.vector_store %arg6[%c0_6, %c0_7], %16 {strides = array<i32>} : memref<2x128xf32, #tpu.memory_space<vmem>>, vector<2x128xf32>,
    %c1_i32 = arith.constant 1 : i32
    %18 = arith.cmpi eq, %arg1, %c1_i32 : i32
    %19 = arith.extui %18 : i1 to i32
    %c0_i32_8 = arith.constant 0 : i32
    %20 = arith.cmpi ne, %19, %c0_i32_8 : i32
    scf.if %20 {
      %c0_9 = arith.constant 0 : index
      %c0_10 = arith.constant 0 : index
      %21 = vector.load %arg6[%c0_9, %c0_10] : memref<2x128xf32, #tpu.memory_space<vmem>>, vector<2x128xf32>
      %cst_11 = arith.constant 0.0714285746 : f32
      %22 = vector.broadcast %cst_11 : f32 to vector<2x128xf32>
      %23 = arith.mulf %21, %22 : vector<2x128xf32>
      %c0_12 = arith.constant 0 : index
      %c0_13 = arith.constant 0 : index
      %24 = vector.load %arg3[%c0_12, %c0_13] : memref<128x256xf32, #tpu.memory_space<vmem>>, vector<128x256xf32>
      %cst_14 = arith.constant dense<0.000000e+00> : vector<2x256xf32>
      %25 = tpu.matmul %23, %24, %cst_14 {dimension_numbers = #tpu.dot_dimension_numbers<[1], [0], [0], [1], [0, 0, 1, 1], [], []>} : vector<2x128xf32>, vector<128x256xf32>, vector<2x256xf32> -> vector<2x256xf32>
      %c0_15 = arith.constant 0 : index
      %c0_16 = arith.constant 0 : index
      %26 = vector.load %arg4[%c0_15, %c0_16] : memref<1x256xf32, #tpu.memory_space<vmem>>, vector<1x256xf32>
      %27 = vector.broadcast %26 : vector<1x256xf32> to vector<2x256xf32>
      %28 = arith.addf %25, %27 : vector<2x256xf32>
      %29 = arith.mulf %28, %28 : vector<2x256xf32>
      %cst_17 = arith.constant dense<0.000000e+00> : vector<2xf32>
      %30 = vector.multi_reduction <add>, %29, %cst_17 [1] : vector<2x256xf32> to vector<2xf32>
      %31 = vector.shape_cast %30 : vector<2xf32> to vector<2x1xf32>
      %cst_18 = arith.constant 1.000000e-24 : f32
      %32 = vector.broadcast %cst_18 : f32 to vector<2x1xf32>
      %33 = arith.maximumf %31, %32 : vector<2x1xf32>
      %34 = math.rsqrt %33 : vector<2x1xf32>
      %35 = vector.broadcast %34 : vector<2x1xf32> to vector<2x256xf32>
      %36 = arith.mulf %28, %35 : vector<2x256xf32>
      %c0_19 = arith.constant 0 : index
      %c0_20 = arith.constant 0 : index
      %37 = vector.load %arg5[%c0_19, %c0_20] : memref<2x256xf32, #tpu.memory_space<vmem>>, vector<2x256xf32>
      tpu.vector_store %arg5[%c0_19, %c0_20], %36 {strides = array<i32>} : memref<2x256xf32, #tpu.memory_space<vmem>>, vector<2x256xf32>,
    } else {
    }
    return
  }
  func.func @transform_0(%arg0: i32, %arg1: i32) -> (i32, i32, i32) {
    %c0_i32 = arith.constant 0 : i32
    %c0_i32_0 = arith.constant 0 : i32
    return %arg0, %arg1, %c0_i32 : i32, i32, i32
  }
  func.func @transform_1(%arg0: i32, %arg1: i32) -> (i32, i32) {
    %c0_i32 = arith.constant 0 : i32
    %c0_i32_0 = arith.constant 0 : i32
    %c0_i32_1 = arith.constant 0 : i32
    return %c0_i32, %c0_i32_0 : i32, i32
  }
  func.func @transform_2(%arg0: i32, %arg1: i32) -> (i32, i32) {
    %c0_i32 = arith.constant 0 : i32
    %c0_i32_0 = arith.constant 0 : i32
    %c0_i32_1 = arith.constant 0 : i32
    return %c0_i32, %c0_i32_0 : i32, i32
  }
  func.func @transform_3(%arg0: i32, %arg1: i32) -> (i32, i32) {
    %c0_i32 = arith.constant 0 : i32
    %c0_i32_0 = arith.constant 0 : i32
    return %arg0, %c0_i32 : i32, i32
  }
}

</mosaic_0001>

<llo_original>
// kernel: tpu_custom_call.1
$region0: #{tpu_custom_call.1}
  #allocation0 [shape = 'u32[]', space=smem, size = 0x4, offset = 0x4, fixed_abs, tag = 'smem constant byte address 0x4 - core index']
  #allocation1 [shape = 'u32[144,128]{1,0:T(1,128)}', space=vmem, size = 0x12000, scoped, tag = 'internal scratch']
  #allocation2 [shape = 'f32[2,128]{1,0:T(2,128)}', space=vmem, size = 0x400, scoped, tag = 'scratch operand']
  %s0 = inlined_call_operand.vmem [shape: f32[2,14,128], index: 0, kind: input, shape index: {}]
  %s1 = inlined_call_operand.hbm [shape: f32[128,256], index: 1, kind: input, shape index: {}]
  %s2 = inlined_call_operand.vmem [shape: f32[1,256], index: 2, kind: input, shape index: {}]
  %s3 = inlined_call_operand.hbm [shape: f32[2,256], index: 3, kind: output, shape index: {}]
  %s4 = sld [smem:[#allocation0]]
  $region95: #{tpu_custom_call.1} parent=0
    _
  %s6 = ssub.s32 1, %s4
  %s7 = scalar_select 0, %s6, %s4
  $region1: #{tpu_custom_call.1} parent=0
    #allocation3 [shape = 'u8[16384]{0}', space=vmem, size = 0x4000, scoped, tag = 'input window, operand 0']
    #allocation4 [shape = 'u8[131072]{0}', space=vmem, size = 0x20000, scoped, tag = 'input window, operand 1, single buffered']
    #allocation5 [shape = 's32[2]{0}', space=sflag, size = 0x8, scoped, tag = 'scoped memory for tpu_custom_call.1']
    #allocation6 [shape = 's32[2]{0}', space=sflag, size = 0x8, scoped, tag = 'scoped memory for tpu_custom_call.1']
    #allocation7 [shape = 'u8[2048]{0}', space=vmem, size = 0x800, scoped, tag = 'output window, operand 0, single buffered']
    %8 = vsyncpa [#allocation5], 0
    %9 = vsyncpa [#allocation6], 0
    loop: start=0, step=1, limit=4
    $region2: #{tpu_custom_call.1} parent=1 // loop_pre_header
      _
    $region3: #{tpu_custom_call.1} parent=1 // loop_header
      %s11 = sphi 0, %s15
      %p12 = scmp.ge.s32.totalorder %s11, 4
      %s18 = sphi 0, %s30
      %s19 = sphi 0, %s26
      %s20 = sphi 0, %s18
      %s21 = sphi 0, %s19
      %s22 = sphi 0, %s20
      %s23 = sphi 0, %s21
      %s35 = sphi 0, %s37
      %s38 = sphi 0, %s35
      %s39 = sphi 0, %s38
      %s55 = sphi 0, %s39
      %s59 = sphi 0, %s59
      %s61 = sphi 0, %s59
      %s62 = sphi 0, %s61
      %s76 = sphi 0, %s62
      %s80 = sphi 0, %s80
      %s82 = sphi 0, %s80
      %s83 = sphi 0, %s82
      %s97 = sphi 0, %s83
      %s103 = sphi 0, %s105
      %s106 = sphi 0, %s103
      %s107 = sphi 0, %s106
      %s123 = sphi 0, %s107
    $region4: #{tpu_custom_call.1} parent=1 // loop_header_branch
      %14 = sbr.rel (%p12) target = $region8
    $region5: #{tpu_custom_call.1} parent=1 // loop_body
      %s16 = ssub.s32 %s11, 1
      %s17 = ssub.s32 %s11, 2
      %s24 = sadd.s32 1, %s19
      %p25 = scmp.ge.s32.totalorder %s24, 2
      %s26 = scalar_select %p25, 0, %s24
      %s27 = sadd.s32 1, %s18
      %s28 = scalar_select %p25, %s27, %s18
      %p29 = scmp.ge.s32.totalorder %s28, 1
      %s30 = scalar_select %p29, 0, %s28
      %s31 = ssub.s32 %s18, %s30
      %s32 = ssub.s32 %s19, %s26
      %s33 = sor.u32 %s31, %s32
      %p34 = scmp.eq.s32.totalorder %s33, 0
      %s36 = sadd.s32 %s35, 1
      %s37 = scalar_select %p34, %s35, %s36
      %p40 = pneg %p34
      %p41 = scmp.eq.s32.totalorder %s11, 1
      %p42 = por %p40, %p41
      %p43 = scmp.ne.s32.totalorder %s35, %s38
      %p44 = scmp.eq.s32.totalorder %s11, 0
      %p45 = por %p43, %p44
      %p46 = scmp.ne.s32.totalorder %s35, %s38
      %p47 = scmp.eq.s32.totalorder %s16, 1
      %p48 = por %p46, %p47
      %p49 = scmp.ne.s32.totalorder %s38, %s39
      %p50 = scmp.eq.s32.totalorder %s16, 0
      %p51 = por %p49, %p50
      %p52 = scmp.ne.s32.totalorder %s38, %s39
      %p53 = scmp.eq.s32.totalorder %s17, 1
      %p54 = por %p52, %p53
      %p56 = scmp.ne.s32.totalorder %s39, %s55
      %p57 = scmp.eq.s32.totalorder %s17, 0
      %p58 = por %p56, %p57
      %s60 = sadd.s32 %s59, 1
      %p63 = scmp.eq.s32.totalorder %s11, 1
      %p64 = scmp.ne.s32.totalorder %s59, %s61
      %p65 = scmp.eq.s32.totalorder %s11, 0
      %p66 = por %p64, %p65
      %p67 = scmp.ne.s32.totalorder %s59, %s61
      %p68 = scmp.eq.s32.totalorder %s16, 1
      %p69 = por %p67, %p68
      %p70 = scmp.ne.s32.totalorder %s61, %s62
      %p71 = scmp.eq.s32.totalorder %s16, 0
      %p72 = por %p70, %p71
      %p73 = scmp.ne.s32.totalorder %s61, %s62
      %p74 = scmp.eq.s32.totalorder %s17, 1
      %p75 = por %p73, %p74
      %p77 = scmp.ne.s32.totalorder %s62, %s76
      %p78 = scmp.eq.s32.totalorder %s17, 0
      %p79 = por %p77, %p78
      %s81 = sadd.s32 %s80, 1
      %p84 = scmp.eq.s32.totalorder %s11, 1
      %p85 = scmp.ne.s32.totalorder %s80, %s82
      %p86 = scmp.eq.s32.totalorder %s11, 0
      %p87 = por %p85, %p86
      %p88 = scmp.ne.s32.totalorder %s80, %s82
      %p89 = scmp.eq.s32.totalorder %s16, 1
      %p90 = por %p88, %p89
      %p91 = scmp.ne.s32.totalorder %s82, %s83
      %p92 = scmp.eq.s32.totalorder %s16, 0
      %p93 = por %p91, %p92
      %p94 = scmp.ne.s32.totalorder %s82, %s83
      %p95 = scmp.eq.s32.totalorder %s17, 1
      %p96 = por %p94, %p95
      %p98 = scmp.ne.s32.totalorder %s83, %s97
      %p99 = scmp.eq.s32.totalorder %s17, 0
      %p100 = por %p98, %p99
      %s101 = ssub.s32 %s18, %s30
      %p102 = scmp.eq.s32.totalorder %s101, 0
      %s104 = sadd.s32 %s103, 1
      %s105 = scalar_select %p102, %s103, %s104
      %p108 = pneg %p102
      %p109 = scmp.eq.s32.totalorder %s11, 1
      %p110 = por %p108, %p109
      %p111 = scmp.ne.s32.totalorder %s103, %s106
      %p112 = scmp.eq.s32.totalorder %s11, 0
      %p113 = por %p111, %p112
      %p114 = scmp.ne.s32.totalorder %s103, %s106
      %p115 = scmp.eq.s32.totalorder %s16, 1
      %p116 = por %p114, %p115
      %p117 = scmp.ne.s32.totalorder %s106, %s107
      %p118 = scmp.eq.s32.totalorder %s16, 0
      %p119 = por %p117, %p118
      %p120 = scmp.ne.s32.totalorder %s106, %s107
      %p121 = scmp.eq.s32.totalorder %s17, 1
      %p122 = por %p120, %p121
      %p124 = scmp.ne.s32.totalorder %s107, %s123
      %p125 = scmp.eq.s32.totalorder %s17, 0
      %p126 = por %p124, %p125
      %p127 = scmp.le.s32.totalorder 1, %s11
      %p128 = scmp.lt.s32.totalorder %s11, 3
      %p129 = pnand %p127, %p128
      %p130 = pneg %p129
      // Predicated region
      $region9: #{tpu_custom_call.1} parent=5 // pred_check
        _
      $region10: #{tpu_custom_call.1} parent=5 // pred_check_branch
        %132 = sbr.rel (%p129) target = $region12
      $region11: #{tpu_custom_call.1} parent=5 // pred_region
        %s133 = ssub.s32 %s11, 1
        // Predicated region
        $region13: #{tpu_custom_call.1} parent=11 // pred_check
          %p134 = pneg %p72
        $region14: #{tpu_custom_call.1} parent=11 // pred_check_branch
          %136 = sbr.rel (%p134) target = $region16
        $region15: #{tpu_custom_call.1} parent=11 // pred_region
          %s138 = ssub.s32 4096, 4096
          %139 = vsyncadd [#allocation5], %s138
          %s140 = sshll.u32 [#allocation4], 4
          %s141 = int_to_ptr.vmem [resolvable:$true] %s140
          %146 = dma.hbm_to_vmem [thread:$0]  %s1, 4096, %s141, [#allocation5], 256, 256, 16
        $region16: #{tpu_custom_call.1} parent=11 // pred_fallthru
          _
        // Predicated region
        $region17: #{tpu_custom_call.1} parent=11 // pred_check
          %p147 = pneg %p93
        $region18: #{tpu_custom_call.1} parent=11 // pred_check_branch
          %149 = sbr.rel (%p147) target = $region20
        $region19: #{tpu_custom_call.1} parent=11 // pred_region
          _
        $region20: #{tpu_custom_call.1} parent=11 // pred_fallthru
          _
      $region12: #{tpu_custom_call.1} parent=5 // pred_fallthru
        _
      %p150 = scmp.lt.s32.totalorder %s11, 2
      // Predicated region
      $region21: #{tpu_custom_call.1} parent=5 // pred_check
        %p151 = pneg %p150
      $region22: #{tpu_custom_call.1} parent=5 // pred_check_branch
        %153 = sbr.rel (%p151) target = $region24
      $region23: #{tpu_custom_call.1} parent=5 // pred_region
        // Predicated region
        $region25: #{tpu_custom_call.1} parent=23 // pred_check
          %p154 = pneg %p45
        $region26: #{tpu_custom_call.1} parent=23 // pred_check_branch
          %156 = sbr.rel (%p154) target = $region28
        $region27: #{tpu_custom_call.1} parent=23 // pred_region
          %s157 = sand.u32 %s35, 1
          %s158 = sand.u32 %s35, 1
          %s159 = smul.addr %s158, 16
          %s160 = scalar_lea.vmem [#allocation3], %s159
          %s161 = smul.u32 2, %s18
          %s162 = smul.addr %s161, 2
          %s163 = sadd.s32 %s19, %s162
          %s164 = smul.addr %s163, 8
          %s165 = scalar_lea.vmem %s0, %s164
          // Predicated region
          $region29: #{tpu_custom_call.1} parent=27 // pred_check
            _
          $region30: #{tpu_custom_call.1} parent=27 // pred_check_branch
            %167 = sbr.rel (0) target = $region32
          $region31: #{tpu_custom_call.1} parent=27 // pred_region
            // Predicated region
            $region33: #{tpu_custom_call.1} parent=31 // pred_check
              _
            $region34: #{tpu_custom_call.1} parent=31 // pred_check_branch
              %169 = sbr.rel (0) target = $region36
            $region35: #{tpu_custom_call.1} parent=31 // pred_region
              // Predicated region
              $region48: #{tpu_custom_call.1} parent=35 // pred_check
                _
              $region49: #{tpu_custom_call.1} parent=35 // pred_check_branch
                %187 = sbr.rel (0) target = $region51
              $region50: #{tpu_custom_call.1} parent=35 // pred_region
                loop: start=0, step=1, limit=1
                $region52: #{tpu_custom_call.1} parent=50 // loop_pre_header
                  _
                $region53: #{tpu_custom_call.1} parent=50 // loop_header
                  %s189 = sphi 0, %s193
                  %p190 = scmp.ge.s32.totalorder %s189, 1
                  %s194 = sphi %s165, %s165
                  %s195 = sphi %s160, %s160
                $region54: #{tpu_custom_call.1} parent=50 // loop_header_branch
                  %192 = sbr.rel (%p190) target = $region58
                $region55: #{tpu_custom_call.1} parent=50 // loop_body
                  %v196 = vld [vmem:[%s194] sm:$0xff]
                  %197 = vst [vmem:[%s195] sm:$0xff] %v196
                  %v198 = vld [vmem:[%s194 + $0x10] sm:$0xff]
                  %199 = vst [vmem:[%s195 + $0x8] sm:$0xff] %v198
                $region56: #{tpu_custom_call.1} parent=50 // loop_footer
                  %s193 = sadd.s32 1, %s189
                $region57: #{tpu_custom_call.1} parent=50 // loop_footer_branch
                  %188 = sbr.rel target = $region53
                $region58: #{tpu_custom_call.1} parent=50 // loop_exit
                  _
              $region51: #{tpu_custom_call.1} parent=35 // pred_fallthru
                _
              // Predicated region
              $region59: #{tpu_custom_call.1} parent=35 // pred_check
                _
              $region60: #{tpu_custom_call.1} parent=35 // pred_check_branch
                %201 = sbr.rel target = $region62
              $region61: #{tpu_custom_call.1} parent=35 // pred_region
                _
              $region62: #{tpu_custom_call.1} parent=35 // pred_fallthru
                _
            $region36: #{tpu_custom_call.1} parent=31 // pred_fallthru
              _
            // Predicated region
            $region37: #{tpu_custom_call.1} parent=31 // pred_check
              _
            $region38: #{tpu_custom_call.1} parent=31 // pred_check_branch
              %171 = sbr.rel target = $region40
            $region39: #{tpu_custom_call.1} parent=31 // pred_region
              %s173 = ssub.s32 256, 1
              loop: start=0, step=1, limit=1
              $region41: #{tpu_custom_call.1} parent=39 // loop_pre_header
                _
              $region42: #{tpu_custom_call.1} parent=39 // loop_header
                %s175 = sphi 0, %s179
                %p176 = scmp.ge.s32.totalorder %s175, 1
                %s180 = sphi %s165, %s165
                %s181 = sphi %s160, %s160
              $region43: #{tpu_custom_call.1} parent=39 // loop_header_branch
                %178 = sbr.rel (%p176) target = $region47
              $region44: #{tpu_custom_call.1} parent=39 // loop_body
                %v182 = vld [vmem:[%s180] sm:%s173]
                %183 = vst [vmem:[%s181] sm:%s173] %v182
                %v184 = vld [vmem:[%s180 + $0x10] sm:%s173]
                %185 = vst [vmem:[%s181 + $0x8] sm:%s173] %v184
              $region45: #{tpu_custom_call.1} parent=39 // loop_footer
                %s179 = sadd.s32 1, %s175
              $region46: #{tpu_custom_call.1} parent=39 // loop_footer_branch
                %174 = sbr.rel target = $region42
              $region47: #{tpu_custom_call.1} parent=39 // loop_exit
                _
            $region40: #{tpu_custom_call.1} parent=31 // pred_fallthru
              _
          $region32: #{tpu_custom_call.1} parent=27 // pred_fallthru
            _
          %202 = vnop
        $region28: #{tpu_custom_call.1} parent=23 // pred_fallthru
          _
      $region24: #{tpu_custom_call.1} parent=5 // pred_fallthru
        _
      %p203 = scmp.le.s32.totalorder 1, %s11
      %p204 = scmp.lt.s32.totalorder %s11, 3
      %p205 = pnand %p203, %p204
      %p206 = pneg %p205
      // Predicated region
      $region63: #{tpu_custom_call.1} parent=5 // pred_check
        _
      $region64: #{tpu_custom_call.1} parent=5 // pred_check_branch
        %208 = sbr.rel (%p205) target = $region66
      $region65: #{tpu_custom_call.1} parent=5 // pred_region
        %s209 = ssub.s32 %s11, 1
        %s210 = sand.u32 %s38, 1
        %s211 = sand.u32 %s38, 1
        %s212 = smul.addr %s211, 16
        %s213 = scalar_lea.vmem [#allocation3], %s212
        // Predicated region
        $region67: #{tpu_custom_call.1} parent=65 // pred_check
          %p214 = pneg %p51
        $region68: #{tpu_custom_call.1} parent=65 // pred_check_branch
          %216 = sbr.rel (%p214) target = $region70
        $region69: #{tpu_custom_call.1} parent=65 // pred_region
          _
        $region70: #{tpu_custom_call.1} parent=65 // pred_fallthru
          _
        // Predicated region
        $region71: #{tpu_custom_call.1} parent=65 // pred_check
          %p217 = pneg %p72
        $region72: #{tpu_custom_call.1} parent=65 // pred_check_branch
          %219 = sbr.rel (%p217) target = $region74
        $region73: #{tpu_custom_call.1} parent=65 // pred_region
          %220 = dma.done [#allocation5], 4096
        $region74: #{tpu_custom_call.1} parent=65 // pred_fallthru
          _
        %s221 = sand.u32 %s38, 1
        %s222 = sand.u32 %s38, 1
        %s223 = smul.addr %s222, 16
        %s224 = scalar_lea.vmem [#allocation3], %s223
        %p225 = pneg %p51
        %p226 = pneg %p48
        %p227 = pneg %p72
        %p228 = pneg %p69
        %p229 = pneg %p93
        %p230 = pneg %p90
        %p231 = pneg %p119
        %p232 = pneg %p116
        %s233 = smul.u32 2, %s20
        %p234 = scmp.eq.s32.totalorder %s21, 0
        // Predicated region
        $region75: #{tpu_custom_call.1} parent=65 // pred_check
          %p235 = pneg %p234
        $region76: #{tpu_custom_call.1} parent=65 // pred_check_branch
          %237 = sbr.rel (%p235) target = $region78
        $region77: #{tpu_custom_call.1} parent=65 // pred_region
          %238 = vst [vmem:[#allocation2] sm:$0x3] 0.0
        $region78: #{tpu_custom_call.1} parent=65 // pred_fallthru
          _
        %v239 = vld [vmem:[%s213] sm:$0xff]
        %v240 = vld [vmem:[%s213 + $0x8] sm:$0xff]
        %v241 = vlaneseq
        %v242 = vshrl.u32 %v241, 7
        %s243 = smul.u32 %s21, 8
        %v244 = vstv %s243
        %v245 = vadd.s32 %v244, %v242
        %vm246 = vcmp.lt.s32.totalorder %v245, 14
        %v247 = vsel %vm246, 1, 0
        %vm248 = vcmp.eq.s32.totalorder %v247, 1
        %v249 = vsel %vm248, %v239, 0.0
        %v250 = vsel %vm248, %v240, 0.0
        %v251 = vld [vmem:[#allocation2] sm:$0x3]
        %v252 = vrot.slane %v249, 4
        %v253 = vadd.f32 %v249, %v252
        %v254 = vrot.slane %v253, 2
        %v255 = vadd.f32 %v253, %v254
        %v256 = vrot.slane %v255, 1
        %v257 = vadd.f32 %v255, %v256
        %v258 = vrot.slane %v250, 4
        %v259 = vadd.f32 %v250, %v258
        %v260 = vrot.slane %v259, 2
        %v261 = vadd.f32 %v259, %v260
        %v262 = vrot.slane %v261, 1
        %v263 = vadd.f32 %v261, %v262
        %vm266 = vcmask 1041409
        %v267 = vsel %vm266, %v263, %v257
        %v269 = vadd.f32 %v251, %v267
        %270 = vst [vmem:[#allocation2] sm:$0x3] %v269
        %p271 = scmp.eq.s32.totalorder %s21, 1
        // Predicated region
        $region79: #{tpu_custom_call.1} parent=65 // pred_check
          %p272 = pneg %p271
        $region80: #{tpu_custom_call.1} parent=65 // pred_check_branch
          %274 = sbr.rel (%p272) target = $region82
        $region81: #{tpu_custom_call.1} parent=65 // pred_region
          %v275 = vld [vmem:[#allocation2] sm:$0x3]
          %v276 = vmul.f32 %v275, 0.071428575
          %v277 = vld [vmem:[#allocation4] sm:$0xff]
          %v278 = vld [vmem:[#allocation4 + $0x8] sm:$0xff]
          %v279 = vld [vmem:[#allocation4 + $0x10] sm:$0xff]
          %v280 = vld [vmem:[#allocation4 + $0x18] sm:$0xff]
          %v281 = vld [vmem:[#allocation4 + $0x20] sm:$0xff]
          %v282 = vld [vmem:[#allocation4 + $0x28] sm:$0xff]
          %v283 = vld [vmem:[#allocation4 + $0x30] sm:$0xff]
          %v284 = vld [vmem:[#allocation4 + $0x38] sm:$0xff]
          %v285 = vld [vmem:[#allocation4 + $0x40] sm:$0xff]
          %v286 = vld [vmem:[#allocation4 + $0x48] sm:$0xff]
          %v287 = vld [vmem:[#allocation4 + $0x50] sm:$0xff]
          %v288 = vld [vmem:[#allocation4 + $0x58] sm:$0xff]
          %v289 = vld [vmem:[#allocation4 + $0x60] sm:$0xff]
          %v290 = vld [vmem:[#allocation4 + $0x68] sm:$0xff]
          %v291 = vld [vmem:[#allocation4 + $0x70] sm:$0xff]
          %v292 = vld [vmem:[#allocation4 + $0x78] sm:$0xff]
          %v293 = vld [vmem:[#allocation4 + $0x80] sm:$0xff]
          %v294 = vld [vmem:[#allocation4 + $0x88] sm:$0xff]
          %v295 = vld [vmem:[#allocation4 + $0x90] sm:$0xff]
          %v296 = vld [vmem:[#allocation4 + $0x98] sm:$0xff]
          %v297 = vld [vmem:[#allocation4 + $0xa0] sm:$0xff]
          %v298 = vld [vmem:[#allocation4 + $0xa8] sm:$0xff]
          %v299 = vld [vmem:[#allocation4 + $0xb0] sm:$0xff]
          %v300 = vld [vmem:[#allocation4 + $0xb8] sm:$0xff]
          %v301 = vld [vmem:[#allocation4 + $0xc0] sm:$0xff]
          %v302 = vld [vmem:[#allocation4 + $0xc8] sm:$0xff]
          %v303 = vld [vmem:[#allocation4 + $0xd0] sm:$0xff]
          %v304 = vld [vmem:[#allocation4 + $0xd8] sm:$0xff]
          %v305 = vld [vmem:[#allocation4 + $0xe0] sm:$0xff]
          %v306 = vld [vmem:[#allocation4 + $0xe8] sm:$0xff]
          %v307 = vld [vmem:[#allocation4 + $0xf0] sm:$0xff]
          %v308 = vld [vmem:[#allocation4 + $0xf8] sm:$0xff]
          %v309 = vld [vmem:[%s2] sm:$0x3]
          %v311 = vlaneseq
          %v312 = vshrl.u32 %v311, 7
          %v313 = vsub.s32 0, %v312
          %v314 = vrot.slane %v309, %v313
          %v315 = vlaneseq
          %v316 = vshrl.u32 %v315, 7
          %v317 = vsub.s32 1, %v316
          %v318 = vrot.slane %v309, %v317
          %321 = vmatprep.subr.mxu0 %v308
          %322 = vmatpush1.msra.mxu0 %v307
          %323 = vmatprep.subr.mxu0 %v306
          %324 = vmatpush1.msra.mxu0 %v305
          %325 = vmatprep.subr.mxu0 %v304
          %326 = vmatpush1.msra.mxu0 %v303
          %327 = vmatprep.subr.mxu0 %v302
          %328 = vmatpush1.msra.mxu0 %v301
          %329 = vmatprep.subr.mxu0 %v300
          %330 = vmatpush1.msra.mxu0 %v299
          %331 = vmatprep.subr.mxu0 %v298
          %332 = vmatpush1.msra.mxu0 %v297
          %333 = vmatprep.subr.mxu0 %v296
          %334 = vmatpush1.msra.mxu0 %v295
          %335 = vmatprep.subr.mxu0 %v294
          %336 = vmatpush1.msra.mxu0 %v293
          %337 = vmatprep.subr.mxu0 %v292
          %338 = vmatpush1.msra.mxu0 %v291
          %339 = vmatprep.subr.mxu0 %v290
          %340 = vmatpush1.msra.mxu0 %v289
          %341 = vmatprep.subr.mxu0 %v288
          %342 = vmatpush1.msra.mxu0 %v287
          %343 = vmatprep.subr.mxu0 %v286
          %344 = vmatpush1.msra.mxu0 %v285
          %345 = vmatprep.subr.mxu0 %v284
          %346 = vmatpush1.msra.mxu0 %v283
          %347 = vmatprep.subr.mxu0 %v282
          %348 = vmatpush1.msra.mxu0 %v281
          %349 = vmatprep.subr.mxu0 %v280
          %350 = vmatpush1.msra.mxu0 %v279
          %351 = vmatprep.subr.mxu0 %v278
          %352 = vmatpush1.msra.mxu0 %v277
          %353 = vmatprep.subr.mxu0 0.0
          %354 = vmatpush2.msra.mxu0 0.0
          %355 = vmatprep.subr.mxu0 0.0
          %356 = vmatpush2.msra.mxu0 0.0
          %357 = vmatprep.subr.mxu0 0.0
          %358 = vmatpush2.msra.mxu0 0.0
          %359 = vmatprep.subr.mxu0 0.0
          %360 = vmatpush2.msra.mxu0 0.0
          %361 = vmatprep.subr.mxu0 0.0
          %362 = vmatpush2.msra.mxu0 0.0
          %363 = vmatprep.subr.mxu0 0.0
          %364 = vmatpush2.msra.mxu0 0.0
          %365 = vmatprep.subr.mxu0 0.0
          %366 = vmatpush2.msra.mxu0 0.0
          %367 = vmatprep.subr.mxu0 0.0
          %368 = vmatpush2.msra.mxu0 0.0
          %369 = vmatprep.subr.mxu0 0.0
          %370 = vmatpush2.msra.mxu0 0.0
          %371 = vmatprep.subr.mxu0 0.0
          %372 = vmatpush2.msra.mxu0 0.0
          %373 = vmatprep.subr.mxu0 0.0
          %374 = vmatpush2.msra.mxu0 0.0
          %375 = vmatprep.subr.mxu0 0.0
          %376 = vmatpush2.msra.mxu0 0.0
          %377 = vmatprep.subr.mxu0 0.0
          %378 = vmatpush2.msra.mxu0 0.0
          %379 = vmatprep.subr.mxu0 0.0
          %380 = vmatpush2.msra.mxu0 0.0
          %381 = vmatprep.subr.mxu0 0.0
          %382 = vmatpush2.msra.mxu0 0.0
          %383 = vmatprep.subr.mxu0 0.0
          %384 = vmatpush2.msra.mxu0 0.0
          %385 = vmatprep.mubr.f32.mxu0 0.0
          %386 = vmatmul.mubr.f32.gmra.mxu0 %v276
          %v387 = vpop.f32.mrf.mxu0
          %v388 = vadd.f32 %v314, %v387
          %v389 = vpop.f32.mrf.mxu0
          %v390 = vadd.f32 %v318, %v389
          %391 = vdwg.mxu0
          %v392 = vmul.f32 %v388, %v388
          %v393 = vmul.f32 %v390, %v390
          %vm394 = vcmask 1041408
          %v395 = vsel %vm394, %v392, 0.0
          %v396 = vsel %vm394, %v393, 0.0
          %v397 = vadd.f32 %v395, %v396
          %398 = vadd.xlane.f32.xlu0 %v397
          %v399 = vpop.xlane.xlu0 %398
          %v400 = vmax.f32 %v399, 1e-24
          %v401 = vrsqrt.pop %v400
          %v402 = vmul.f32 %v388, %v401
          %v403 = vmul.f32 %v390, %v401
          %v406 = vcombine.low %v402, %v403
          %v408 = vunpack.c.l.s4 1983009808
          %v409 = vunpack.c.0.s8 %v408
          %v410 = vlaneseq
          %v411 = vshrl.u32 %v410, 7
          %v412 = vsub.s32 %v409, %v411
          %v413 = vrot.slane %v406, %v412
          %415 = vst [vmem:[#allocation7] sm:$0xf] %v413
        $region82: #{tpu_custom_call.1} parent=65 // pred_fallthru
          _
        // Predicated region
        $region83: #{tpu_custom_call.1} parent=65 // pred_check
          %p416 = pneg %p116
        $region84: #{tpu_custom_call.1} parent=65 // pred_check_branch
          %418 = sbr.rel (%p416) target = $region86
        $region85: #{tpu_custom_call.1} parent=65 // pred_region
          %s420 = ssub.s32 64, 64
          %421 = vsyncadd [#allocation6], %s420
          %s422 = smul.addr %s20, 2
          %s423 = smul.addr %s422, 32
          %s424 = scalar_lea.hbm %s3, %s423
          %s426 = sshll.u32 [#allocation7], 4
          %s427 = int_to_ptr.vmem [resolvable:$true] %s426
          %429 = dma.vmem_to_hbm [thread:$0]  %s427, 64, %s424, [#allocation6]
        $region86: #{tpu_custom_call.1} parent=65 // pred_fallthru
          _
        // Predicated region
        $region87: #{tpu_custom_call.1} parent=65 // pred_check
          %p430 = pneg %p116
        $region88: #{tpu_custom_call.1} parent=65 // pred_check_branch
          %432 = sbr.rel (%p430) target = $region90
        $region89: #{tpu_custom_call.1} parent=65 // pred_region
          %433 = dma.done [#allocation6], 64
        $region90: #{tpu_custom_call.1} parent=65 // pred_fallthru
          _
      $region66: #{tpu_custom_call.1} parent=5 // pred_fallthru
        _
      %p434 = scmp.le.s32.totalorder 2, %s11
      // Predicated region
      $region91: #{tpu_custom_call.1} parent=5 // pred_check
        %p435 = pneg %p434
      $region92: #{tpu_custom_call.1} parent=5 // pred_check_branch
        %437 = sbr.rel (%p435) target = $region94
      $region93: #{tpu_custom_call.1} parent=5 // pred_region
        %s438 = ssub.s32 %s11, 2
      $region94: #{tpu_custom_call.1} parent=5 // pred_fallthru
        _
    $region6: #{tpu_custom_call.1} parent=1 // loop_footer
      %s15 = sadd.s32 1, %s11
    $region7: #{tpu_custom_call.1} parent=1 // loop_footer_branch
      %10 = sbr.rel target = $region3
    $region8: #{tpu_custom_call.1} parent=1 // loop_exit
      _
    %439 = vsyncpa [#allocation5], 1
    %s440 = scalar_lea.sflag [#allocation5], 1
    %441 = vsyncpa %s440, 1
    %442 = vsyncpa [#allocation6], 1
    %s443 = scalar_lea.sflag [#allocation6], 1
    %444 = vsyncpa %s443, 1

</llo_original>
